<compile_context>
chip_gen: v6e
topology: v6e:2x2x1
jax: 0.10.0
libtpu: 0.0.40
codegen_flags: <defaults>
</compile_context>

<pallas_src>
import math
import jax
import jax.numpy as jnp
from jax.experimental import pallas as pl
from jax.experimental.pallas import tpu as pltpu


def linear_kernel(x_ref, w_ref, b_ref, o_ref, acc_ref):
    # x_ref: (tm, tk) bf16   w_ref: (tk, tn) bf16   b_ref: (1, tn) f32
    # o_ref: (tm, tn) f32    acc_ref: (tm, tn) f32 scratch
    k = pl.program_id(2)

    @pl.when(k == 0)
    def _():
        acc_ref[...] = jnp.zeros_like(acc_ref)

    acc_ref[...] += jnp.dot(x_ref[...], w_ref[...],
                            preferred_element_type=jnp.float32)

    @pl.when(k == pl.num_programs(2) - 1)
    def _():
        o_ref[...] = (acc_ref[...] + b_ref[...]).astype(o_ref.dtype)


def _round_up(v, m):
    return ((v + m - 1) // m) * m


def _vmem_capacity_and_two_tc():
    """Per-generation VMEM capacity + whether this is a 2-TensorCore part."""
    vmem_capacity = 64 * 1024 * 1024  # conservative default (v7x-sized)
    two_tc = False
    try:
        info = pltpu.get_tpu_info()
        vmem_capacity = int(info.vmem_capacity_bytes)
    except Exception:
        pass
    try:
        kind = jax.devices()[0].device_kind.lower()
        two_tc = "7" in kind  # v7x-class chips: 2 TensorCores share the chip
    except Exception:
        pass
    return vmem_capacity, two_tc


def _working_set_bytes(tm, tn, tk):
    # Double-buffered bf16 x / weight tiles + f32 bias tile, double-buffered
    # f32 output tile, plus the f32 accumulator scratch.
    in_b = 2 * ((tm * tk + tk * tn) * 2 + tn * 4)
    out_b = 2 * tm * tn * 4
    acc_b = tm * tn * 4
    return in_b + out_b + acc_b


def _pick_m_tile(M):
    """Largest M tile with <=~25% padding waste; M padded to a multiple of 16
    (bf16 sublane packing)."""
    mp16 = _round_up(max(M, 1), 16)
    limit = max(mp16, (M * 5 + 3) // 4)
    for c in (512, 256, 128, 64, 32):
        if _round_up(M, c) <= limit:
            return c, _round_up(M, c)
    return 16, mp16


def _pick_n_tile(N):
    """Largest lane-dense N tile with <=~25% padding waste; N padded to a
    multiple of 128 (unmasked lane-dense stores)."""
    np128 = _round_up(max(N, 1), 128)
    limit = max(np128, (N * 5 + 3) // 4)
    for c in (1024, 512, 256):
        if _round_up(N, c) <= limit:
            return c, _round_up(N, c)
    return 128, np128


def _fit_tiles(tm, tn, Np, Kp, budget):
    """Choose tk (and shrink tn/tm if needed) so the working set fits budget."""
    # Prefer a single K block: the weight panel's block index is then (0, j),
    # constant across the i sweep, so Pallas DMAs it once per N block and it is
    # reused across the whole batch instead of being re-streamed per (i,k).
    if _working_set_bytes(tm, tn, Kp) <= budget:
        return tm, tn, Kp
    tk = None
    for c in (2048, 1024, 512, 256, 128):
        if c <= Kp and Kp % c == 0 and _working_set_bytes(tm, tn, c) <= budget:
            tk = c
            break
    if tk is None:
        tk = 128
        while _working_set_bytes(tm, tn, tk) > budget and tn > 128:
            tn //= 2
        while _working_set_bytes(tm, tn, tk) > budget and tm > 16:
            tm //= 2
    return tm, tn, tk


def prune_linear_forward(x, weight, bias):
    """x: (M, K) f32, weight: (N, K) f32 (PyTorch layout), bias: (N,) f32.

    Returns x @ weight.T + bias as (M, N) float32.
    """
    M, K = x.shape
    N, K2 = weight.shape
    assert K == K2 and bias.shape == (N,)

    vmem_capacity, two_tc = _vmem_capacity_and_two_tc()
    budget = (vmem_capacity * 3) // 4  # ~96 MiB on 128 MiB parts, ~48 MiB on v7x

    tm, Mp = _pick_m_tile(M)
    tn, Np = _pick_n_tile(N)
    Kp = _round_up(K, 128)
    tm, tn, tk = _fit_tiles(tm, tn, Np, Kp, budget)

    # Only split N for load balance on 2-TensorCore parts; on single-TC
    # v5e/v6e it would just double grid steps and halve store width.
    if two_tc and (Np // tn) * (Mp // tm) < 2 and tn >= 256:
        tn //= 2

    # Zero-pad to the block grid (zeros contribute nothing to the dot).
    xp = x if (Mp, Kp) == (M, K) else jnp.pad(x, ((0, Mp - M), (0, Kp - K)))
    wt = weight.T  # (K, N): one-time transpose of a static parameter, done by
    #                XLA outside the kernel.
    wp = wt if (Kp, Np) == (K, N) else jnp.pad(wt, ((0, Kp - K), (0, Np - N)))
    bp = bias if Np == N else jnp.pad(bias, (0, Np - N))

    x_bf = xp.astype(jnp.bfloat16)
    w_bf = wp.astype(jnp.bfloat16)
    b2 = bp.reshape(1, Np).astype(jnp.float32)

    grid = (Np // tn, Mp // tm, Kp // tk)  # j (N) slow, i (M) middle, k fast

    wset = _working_set_bytes(tm, tn, tk)
    vmem_limit = int(min(vmem_capacity,
                         max(wset + wset // 4 + (4 << 20), 32 << 20)))

    cost = pl.CostEstimate(
        flops=2 * Mp * Np * Kp,
        transcendentals=0,
        bytes_accessed=2 * (Mp * Kp + Kp * Np) + 4 * (Mp * Np + Np))

    # TODO(synk): on v5e/v6e with many k steps and tiny tm, trying
    # pipeline_mode=pl.Buffered(3) on the x/weight BlockSpecs could hide the
    # exposed weight-panel DMA; kept at the default depth 2 here.
    out_p = pl.pallas_call(
        linear_kernel,
        out_shape=jax.ShapeDtypeStruct((Mp, Np), jnp.float32),
        grid_spec=pltpu.PrefetchScalarGridSpec(
            num_scalar_prefetch=0,
            grid=grid,
            in_specs=[
                pl.BlockSpec((tm, tk), lambda j, i, k: (i, k)),   # x tile (bf16)
                pl.BlockSpec((tk, tn), lambda j, i, k: (k, j)),   # W^T tile (bf16)
                pl.BlockSpec((1, tn), lambda j, i, k: (0, j)),    # bias tile (f32)
            ],
            out_specs=pl.BlockSpec((tm, tn), lambda j, i, k: (i, j)),
            scratch_shapes=[pltpu.VMEM((tm, tn), jnp.float32)],
        ),
        compiler_params=pltpu.CompilerParams(
            dimension_semantics=("parallel", "parallel", "arbitrary"),
            vmem_limit_bytes=vmem_limit),
        cost_estimate=cost,
    )(x_bf, w_bf, b2)

    if (Mp, Np) != (M, N):
        out_p = out_p[:M, :N]
    return out_p


def init_prune_linear_params(key, in_features, out_features):
    """Deterministic init matching PruneLinear.__init__:
    weight ~ N(0, sqrt(2/(m+n))); bias keeps nn.Linear default U(-1/sqrt(m), 1/sqrt(m))."""
    kw, kb = jax.random.split(key)
    std = math.sqrt(2.0 / (in_features + out_features))
    weight = std * jax.random.normal(kw, (out_features, in_features), dtype=jnp.float32)
    bound = 1.0 / math.sqrt(in_features)
    bias = jax.random.uniform(kb, (out_features,), minval=-bound, maxval=bound,
                              dtype=jnp.float32)
    return weight, bias


if __name__ == "__main__":
    key = jax.random.PRNGKey(0)
    kx, kp = jax.random.split(key)

    batch = 8
    in_features = 256
    out_features = 512

    x = jax.random.normal(kx, (batch, in_features), dtype=jnp.float32)
    weight, bias = init_prune_linear_params(kp, in_features, out_features)

    out = prune_linear_forward(x, weight, bias)
    out = jax.block_until_ready(out)

    # correctness check vs. plain JAX f32 reference of F.linear; tolerance is
    # loosened because the kernel uses bf16 operands (f32 accumulation).
    ref = x @ weight.T + bias
    assert out.shape == (batch, out_features)
    assert jnp.allclose(out, ref, atol=5e-2, rtol=5e-2)

    print("KERNEL_OK")
</pallas_src>

<mosaic_0001>
module attributes {stable_mosaic.version = 11 : i64} {
  func.func @linear_kernel(%arg0: i32, %arg1: i32, %arg2: i32, %arg3: memref<16x256xbf16, #tpu.memory_space<vmem>>, %arg4: memref<256x512xbf16, #tpu.memory_space<vmem>>, %arg5: memref<1x512xf32, #tpu.memory_space<vmem>>, %arg6: memref<16x512xf32, #tpu.memory_space<vmem>>, %arg7: memref<16x512xf32, #tpu.memory_space<vmem>>) attributes {dimension_semantics = [#tpu.dimension_semantics<parallel>, #tpu.dimension_semantics<parallel>, #tpu.dimension_semantics<arbitrary>], iteration_bounds = array<i64: 1, 1, 1>, scalar_prefetch = 0 : i64, scratch_operands = 1 : i64, tpu.core_type = #tpu.core_type<tc>, window_params = [{transform_indices = @transform_0, window_bounds = array<i64: 16, 256>}, {transform_indices = @transform_1, window_bounds = array<i64: 256, 512>}, {transform_indices = @transform_2, window_bounds = array<i64: 1, 512>}, {transform_indices = @transform_3, window_bounds = array<i64: 16, 512>}]} {
    %c0_i32 = arith.constant 0 : i32
    %0 = arith.cmpi eq, %arg2, %c0_i32 : i32
    %1 = arith.extui %0 : i1 to i32
    %c0_i32_0 = arith.constant 0 : i32
    %2 = arith.cmpi ne, %1, %c0_i32_0 : i32
    scf.if %2 {
      %cst_10 = arith.constant 0.000000e+00 : f32
      %12 = vector.broadcast %cst_10 : f32 to vector<16x512xf32>
      %c0_11 = arith.constant 0 : index
      %c0_12 = arith.constant 0 : index
      %13 = vector.load %arg7[%c0_11, %c0_12] : memref<16x512xf32, #tpu.memory_space<vmem>>, vector<16x512xf32>
      tpu.vector_store %arg7[%c0_11, %c0_12], %12 {strides = array<i32>} : memref<16x512xf32, #tpu.memory_space<vmem>>, vector<16x512xf32>,
    } else {
    }
    %c0 = arith.constant 0 : index
    %c0_1 = arith.constant 0 : index
    %3 = vector.load %arg7[%c0, %c0_1] : memref<16x512xf32, #tpu.memory_space<vmem>>, vector<16x512xf32>
    %c0_2 = arith.constant 0 : index
    %c0_3 = arith.constant 0 : index
    %4 = vector.load %arg3[%c0_2, %c0_3] : memref<16x256xbf16, #tpu.memory_space<vmem>>, vector<16x256xbf16>
    %c0_4 = arith.constant 0 : index
    %c0_5 = arith.constant 0 : index
    %5 = vector.load %arg4[%c0_4, %c0_5] : memref<256x512xbf16, #tpu.memory_space<vmem>>, vector<256x512xbf16>
    %cst = arith.constant dense<0.000000e+00> : vector<16x512xf32>
    %6 = tpu.matmul %4, %5, %cst {dimension_numbers = #tpu.dot_dimension_numbers<[1], [0], [0], [1], [0, 0, 1, 1], [], []>} : vector<16x256xbf16>, vector<256x512xbf16>, vector<16x512xf32> -> vector<16x512xf32>
    %7 = arith.addf %3, %6 : vector<16x512xf32>
    %c0_6 = arith.constant 0 : index
    %c0_7 = arith.constant 0 : index
    %8 = vector.load %arg7[%c0_6, %c0_7] : memref<16x512xf32, #tpu.memory_space<vmem>>, vector<16x512xf32>
    tpu.vector_store %arg7[%c0_6, %c0_7], %7 {strides = array<i32>} : memref<16x512xf32, #tpu.memory_space<vmem>>, vector<16x512xf32>,
    %c0_i32_8 = arith.constant 0 : i32
    %9 = arith.cmpi eq, %arg2, %c0_i32_8 : i32
    %10 = arith.extui %9 : i1 to i32
    %c0_i32_9 = arith.constant 0 : i32
    %11 = arith.cmpi ne, %10, %c0_i32_9 : i32
    scf.if %11 {
      %c0_10 = arith.constant 0 : index
      %c0_11 = arith.constant 0 : index
      %12 = vector.load %arg7[%c0_10, %c0_11] : memref<16x512xf32, #tpu.memory_space<vmem>>, vector<16x512xf32>
      %c0_12 = arith.constant 0 : index
      %c0_13 = arith.constant 0 : index
      %13 = vector.load %arg5[%c0_12, %c0_13] : memref<1x512xf32, #tpu.memory_space<vmem>>, vector<1x512xf32>
      %14 = vector.broadcast %13 : vector<1x512xf32> to vector<16x512xf32>
      %15 = arith.addf %12, %14 : vector<16x512xf32>
      %c0_14 = arith.constant 0 : index
      %c0_15 = arith.constant 0 : index
      %16 = vector.load %arg6[%c0_14, %c0_15] : memref<16x512xf32, #tpu.memory_space<vmem>>, vector<16x512xf32>
      tpu.vector_store %arg6[%c0_14, %c0_15], %15 {strides = array<i32>} : memref<16x512xf32, #tpu.memory_space<vmem>>, vector<16x512xf32>,
    } else {
    }
    return
  }
  func.func @transform_0(%arg0: i32, %arg1: i32, %arg2: i32) -> (i32, i32) {
    %c0_i32 = arith.constant 0 : i32
    return %arg1, %arg2 : i32, i32
  }
  func.func @transform_1(%arg0: i32, %arg1: i32, %arg2: i32) -> (i32, i32) {
    %c0_i32 = arith.constant 0 : i32
    return %arg2, %arg0 : i32, i32
  }
  func.func @transform_2(%arg0: i32, %arg1: i32, %arg2: i32) -> (i32, i32) {
    %c0_i32 = arith.constant 0 : i32
    %c0_i32_0 = arith.constant 0 : i32
    return %c0_i32, %arg0 : i32, i32
  }
  func.func @transform_3(%arg0: i32, %arg1: i32, %arg2: i32) -> (i32, i32) {
    %c0_i32 = arith.constant 0 : i32
    return %arg1, %arg0 : i32, i32
  }
}

</mosaic_0001>

<llo_original>
// kernel: tpu_custom_call.1
$region0: #{tpu_custom_call.1}
  #allocation0 [shape = 'u32[]', space=smem, size = 0x4, offset = 0x4, fixed_abs, tag = 'smem constant byte address 0x4 - core index']
  #allocation1 [shape = 'u32[144,128]{1,0:T(1,128)}', space=vmem, size = 0x12000, scoped, tag = 'internal scratch']
  #allocation2 [shape = 'f32[16,512]{1,0:T(8,128)}', space=vmem, size = 0x8000, scoped, tag = 'scratch operand']
  %s0 = inlined_call_operand.hbm [shape: bf16[16,256], index: 0, kind: input, shape index: {}]
  %s1 = inlined_call_operand.hbm [shape: bf16[256,512], index: 1, kind: input, shape index: {}]
  %s2 = inlined_call_operand.hbm [shape: f32[1,512], index: 2, kind: input, shape index: {}]
  %s3 = inlined_call_operand.hbm [shape: f32[16,512], index: 3, kind: output, shape index: {}]
  %s4 = sld [smem:[#allocation0]]
  $region42: #{tpu_custom_call.1} parent=0
    _
  %s6 = ssub.s32 1, %s4
  %s7 = scalar_select 0, %s6, %s4
  $region1: #{tpu_custom_call.1} parent=0
    #allocation3 [shape = 'u8[8192]{0}', space=vmem, size = 0x2000, scoped, tag = 'input window, operand 0, single buffered']
    #allocation4 [shape = 's32[1]{0}', space=sflag, size = 0x4, scoped, tag = 'scoped memory for tpu_custom_call.1']
    #allocation5 [shape = 's32[1]{0}', space=sflag, size = 0x4, scoped, tag = 'scoped memory for tpu_custom_call.1']
    #allocation6 [shape = 'u8[262144]{0}', space=vmem, size = 0x40000, scoped, tag = 'input window, operand 1, single buffered']
    #allocation7 [shape = 's32[1]{0}', space=sflag, size = 0x4, scoped, tag = 'scoped memory for tpu_custom_call.1']
    #allocation8 [shape = 'u8[2048]{0}', space=vmem, size = 0x800, scoped, tag = 'input window, operand 2, single buffered']
    #allocation9 [shape = 'u8[32768]{0}', space=vmem, size = 0x8000, scoped, tag = 'output window, operand 0, single buffered']
    %8 = vsyncpa [#allocation4], 0
    %9 = vsyncpa [#allocation7], 0
    %10 = vsyncpa [#allocation5], 0
    // Predicated region
    $region2: #{tpu_custom_call.1} parent=1 // pred_check
      _
    $region3: #{tpu_custom_call.1} parent=1 // pred_check_branch
      %12 = sbr.rel (0) target = $region5
    $region4: #{tpu_custom_call.1} parent=1 // pred_region
      %s14 = ssub.s32 256, 256
      %15 = vsyncadd [#allocation4], %s14
      %s16 = sshll.u32 [#allocation3], 4
      %s17 = int_to_ptr.vmem [resolvable:$true] %s16
      %22 = dma.hbm_to_vmem [thread:$0]  %s0, 256, %s17, [#allocation4], 128, 128, 8
    $region5: #{tpu_custom_call.1} parent=1 // pred_fallthru
      _
    // Predicated region
    $region6: #{tpu_custom_call.1} parent=1 // pred_check
      _
    $region7: #{tpu_custom_call.1} parent=1 // pred_check_branch
      %24 = sbr.rel (0) target = $region9
    $region8: #{tpu_custom_call.1} parent=1 // pred_region
      %s26 = ssub.s32 8192, 8192
      %27 = vsyncadd [#allocation7], %s26
      %s28 = sshll.u32 [#allocation6], 4
      %s29 = int_to_ptr.vmem [resolvable:$true] %s28
      %34 = dma.hbm_to_vmem [thread:$0]  %s1, 8192, %s29, [#allocation7], 256, 256, 16
    $region9: #{tpu_custom_call.1} parent=1 // pred_fallthru
      _
    // Predicated region
    $region10: #{tpu_custom_call.1} parent=1 // pred_check
      _
    $region11: #{tpu_custom_call.1} parent=1 // pred_check_branch
      %36 = sbr.rel (0) target = $region13
    $region12: #{tpu_custom_call.1} parent=1 // pred_region
      %s38 = ssub.s32 64, 64
      %39 = vsyncadd [#allocation7], %s38
      %s41 = sshll.u32 [#allocation8], 4
      %s42 = int_to_ptr.vmem [resolvable:$true] %s41
      %44 = dma.hbm_to_vmem [thread:$0]  %s2, 64, %s42, [#allocation7]
    $region13: #{tpu_custom_call.1} parent=1 // pred_fallthru
      _
    // Predicated region
    $region14: #{tpu_custom_call.1} parent=1 // pred_check
      _
    $region15: #{tpu_custom_call.1} parent=1 // pred_check_branch
      %46 = sbr.rel (0) target = $region17
    $region16: #{tpu_custom_call.1} parent=1 // pred_region
      %47 = dma.done [#allocation4], 256
    $region17: #{tpu_custom_call.1} parent=1 // pred_fallthru
      _
    // Predicated region
    $region18: #{tpu_custom_call.1} parent=1 // pred_check
      _
    $region19: #{tpu_custom_call.1} parent=1 // pred_check_branch
      %49 = sbr.rel (0) target = $region21
    $region20: #{tpu_custom_call.1} parent=1 // pred_region
      %50 = dma.done [#allocation7], 8192
    $region21: #{tpu_custom_call.1} parent=1 // pred_fallthru
      _
    // Predicated region
    $region22: #{tpu_custom_call.1} parent=1 // pred_check
      _
    $region23: #{tpu_custom_call.1} parent=1 // pred_check_branch
      %52 = sbr.rel (0) target = $region25
    $region24: #{tpu_custom_call.1} parent=1 // pred_region
      %53 = dma.done [#allocation7], 64
    $region25: #{tpu_custom_call.1} parent=1 // pred_fallthru
      _
    %p54 = scmp.eq.s32.totalorder 0, 0
    // Predicated region
    $region26: #{tpu_custom_call.1} parent=1 // pred_check
      %p55 = pneg %p54
    $region27: #{tpu_custom_call.1} parent=1 // pred_check_branch
      %57 = sbr.rel (%p55) target = $region29
    $region28: #{tpu_custom_call.1} parent=1 // pred_region
      %58 = vst [vmem:[#allocation2] sm:$0xff] 0.0
      %59 = vst [vmem:[#allocation2 + $0x8] sm:$0xff] 0.0
      %60 = vst [vmem:[#allocation2 + $0x10] sm:$0xff] 0.0
      %61 = vst [vmem:[#allocation2 + $0x18] sm:$0xff] 0.0
      %62 = vst [vmem:[#allocation2 + $0x20] sm:$0xff] 0.0
      %63 = vst [vmem:[#allocation2 + $0x28] sm:$0xff] 0.0
      %64 = vst [vmem:[#allocation2 + $0x30] sm:$0xff] 0.0
      %65 = vst [vmem:[#allocation2 + $0x38] sm:$0xff] 0.0
    $region29: #{tpu_custom_call.1} parent=1 // pred_fallthru
      _
    %v66 = vld [vmem:[#allocation2] sm:$0xff]
    %v67 = vld [vmem:[#allocation2 + $0x8] sm:$0xff]
    %v68 = vld [vmem:[#allocation2 + $0x10] sm:$0xff]
    %v69 = vld [vmem:[#allocation2 + $0x18] sm:$0xff]
    %v70 = vld [vmem:[#allocation2 + $0x20] sm:$0xff]
    %v71 = vld [vmem:[#allocation2 + $0x28] sm:$0xff]
    %v72 = vld [vmem:[#allocation2 + $0x30] sm:$0xff]
    %v73 = vld [vmem:[#allocation2 + $0x38] sm:$0xff]
    %v74 = vld [vmem:[#allocation3] sm:$0xff]
    %v75 = vld [vmem:[#allocation3 + $0x8] sm:$0xff]
    %v76 = vld [vmem:[#allocation6] sm:$0xff]
    %v77 = vld [vmem:[#allocation6 + $0x8] sm:$0xff]
    %v78 = vld [vmem:[#allocation6 + $0x10] sm:$0xff]
    %v79 = vld [vmem:[#allocation6 + $0x18] sm:$0xff]
    %v80 = vld [vmem:[#allocation6 + $0x20] sm:$0xff]
    %v81 = vld [vmem:[#allocation6 + $0x28] sm:$0xff]
    %v82 = vld [vmem:[#allocation6 + $0x30] sm:$0xff]
    %v83 = vld [vmem:[#allocation6 + $0x38] sm:$0xff]
    %v84 = vld [vmem:[#allocation6 + $0x40] sm:$0xff]
    %v85 = vld [vmem:[#allocation6 + $0x48] sm:$0xff]
    %v86 = vld [vmem:[#allocation6 + $0x50] sm:$0xff]
    %v87 = vld [vmem:[#allocation6 + $0x58] sm:$0xff]
    %v88 = vld [vmem:[#allocation6 + $0x60] sm:$0xff]
    %v89 = vld [vmem:[#allocation6 + $0x68] sm:$0xff]
    %v90 = vld [vmem:[#allocation6 + $0x70] sm:$0xff]
    %v91 = vld [vmem:[#allocation6 + $0x78] sm:$0xff]
    %v92 = vld [vmem:[#allocation6 + $0x80] sm:$0xff]
    %v93 = vld [vmem:[#allocation6 + $0x88] sm:$0xff]
    %v94 = vld [vmem:[#allocation6 + $0x90] sm:$0xff]
    %v95 = vld [vmem:[#allocation6 + $0x98] sm:$0xff]
    %v96 = vld [vmem:[#allocation6 + $0xa0] sm:$0xff]
    %v97 = vld [vmem:[#allocation6 + $0xa8] sm:$0xff]
    %v98 = vld [vmem:[#allocation6 + $0xb0] sm:$0xff]
    %v99 = vld [vmem:[#allocation6 + $0xb8] sm:$0xff]
    %v100 = vld [vmem:[#allocation6 + $0xc0] sm:$0xff]
    %v101 = vld [vmem:[#allocation6 + $0xc8] sm:$0xff]
    %v102 = vld [vmem:[#allocation6 + $0xd0] sm:$0xff]
    %v103 = vld [vmem:[#allocation6 + $0xd8] sm:$0xff]
    %v104 = vld [vmem:[#allocation6 + $0xe0] sm:$0xff]
    %v105 = vld [vmem:[#allocation6 + $0xe8] sm:$0xff]
    %v106 = vld [vmem:[#allocation6 + $0xf0] sm:$0xff]
    %v107 = vld [vmem:[#allocation6 + $0xf8] sm:$0xff]
    %v108 = vld [vmem:[#allocation6 + $0x100] sm:$0xff]
    %v109 = vld [vmem:[#allocation6 + $0x108] sm:$0xff]
    %v110 = vld [vmem:[#allocation6 + $0x110] sm:$0xff]
    %v111 = vld [vmem:[#allocation6 + $0x118] sm:$0xff]
    %v112 = vld [vmem:[#allocation6 + $0x120] sm:$0xff]
    %v113 = vld [vmem:[#allocation6 + $0x128] sm:$0xff]
    %v114 = vld [vmem:[#allocation6 + $0x130] sm:$0xff]
    %v115 = vld [vmem:[#allocation6 + $0x138] sm:$0xff]
    %v116 = vld [vmem:[#allocation6 + $0x140] sm:$0xff]
    %v117 = vld [vmem:[#allocation6 + $0x148] sm:$0xff]
    %v118 = vld [vmem:[#allocation6 + $0x150] sm:$0xff]
    %v119 = vld [vmem:[#allocation6 + $0x158] sm:$0xff]
    %v120 = vld [vmem:[#allocation6 + $0x160] sm:$0xff]
    %v121 = vld [vmem:[#allocation6 + $0x168] sm:$0xff]
    %v122 = vld [vmem:[#allocation6 + $0x170] sm:$0xff]
    %v123 = vld [vmem:[#allocation6 + $0x178] sm:$0xff]
    %v124 = vld [vmem:[#allocation6 + $0x180] sm:$0xff]
    %v125 = vld [vmem:[#allocation6 + $0x188] sm:$0xff]
    %v126 = vld [vmem:[#allocation6 + $0x190] sm:$0xff]
    %v127 = vld [vmem:[#allocation6 + $0x198] sm:$0xff]
    %v128 = vld [vmem:[#allocation6 + $0x1a0] sm:$0xff]
    %v129 = vld [vmem:[#allocation6 + $0x1a8] sm:$0xff]
    %v130 = vld [vmem:[#allocation6 + $0x1b0] sm:$0xff]
    %v131 = vld [vmem:[#allocation6 + $0x1b8] sm:$0xff]
    %v132 = vld [vmem:[#allocation6 + $0x1c0] sm:$0xff]
    %v133 = vld [vmem:[#allocation6 + $0x1c8] sm:$0xff]
    %v134 = vld [vmem:[#allocation6 + $0x1d0] sm:$0xff]
    %v135 = vld [vmem:[#allocation6 + $0x1d8] sm:$0xff]
    %v136 = vld [vmem:[#allocation6 + $0x1e0] sm:$0xff]
    %v137 = vld [vmem:[#allocation6 + $0x1e8] sm:$0xff]
    %v138 = vld [vmem:[#allocation6 + $0x1f0] sm:$0xff]
    %v139 = vld [vmem:[#allocation6 + $0x1f8] sm:$0xff]
    %v142 = vunpack.c.l.b16 %v74
    %v143 = vunpack.c.h.b16 %v74
    %v144 = vunpack.c.l.b16 %v75
    %v145 = vunpack.c.h.b16 %v75
    %v146 = vpack.c.b16 %v144, %v142
    %v147 = vpack.c.b16 %v145, %v143
    %v214 = vunpack.c.l.b16 %v76
    %v215 = vunpack.c.h.b16 %v76
    %v216 = vunpack.c.l.b16 %v77
    %v217 = vunpack.c.h.b16 %v77
    %v218 = vunpack.c.l.b16 %v78
    %v219 = vunpack.c.h.b16 %v78
    %v220 = vunpack.c.l.b16 %v79
    %v221 = vunpack.c.h.b16 %v79
    %v222 = vunpack.c.l.b16 %v80
    %v223 = vunpack.c.h.b16 %v80
    %v224 = vunpack.c.l.b16 %v81
    %v225 = vunpack.c.h.b16 %v81
    %v226 = vunpack.c.l.b16 %v82
    %v227 = vunpack.c.h.b16 %v82
    %v228 = vunpack.c.l.b16 %v83
    %v229 = vunpack.c.h.b16 %v83
    %v230 = vunpack.c.l.b16 %v84
    %v231 = vunpack.c.h.b16 %v84
    %v232 = vunpack.c.l.b16 %v85
    %v233 = vunpack.c.h.b16 %v85
    %v234 = vunpack.c.l.b16 %v86
    %v235 = vunpack.c.h.b16 %v86
    %v236 = vunpack.c.l.b16 %v87
    %v237 = vunpack.c.h.b16 %v87
    %v238 = vunpack.c.l.b16 %v88
    %v239 = vunpack.c.h.b16 %v88
    %v240 = vunpack.c.l.b16 %v89
    %v241 = vunpack.c.h.b16 %v89
    %v242 = vunpack.c.l.b16 %v90
    %v243 = vunpack.c.h.b16 %v90
    %v244 = vunpack.c.l.b16 %v91
    %v245 = vunpack.c.h.b16 %v91
    %v246 = vunpack.c.l.b16 %v92
    %v247 = vunpack.c.h.b16 %v92
    %v248 = vunpack.c.l.b16 %v93
    %v249 = vunpack.c.h.b16 %v93
    %v250 = vunpack.c.l.b16 %v94
    %v251 = vunpack.c.h.b16 %v94
    %v252 = vunpack.c.l.b16 %v95
    %v253 = vunpack.c.h.b16 %v95
    %v254 = vunpack.c.l.b16 %v96
    %v255 = vunpack.c.h.b16 %v96
    %v256 = vunpack.c.l.b16 %v97
    %v257 = vunpack.c.h.b16 %v97
    %v258 = vunpack.c.l.b16 %v98
    %v259 = vunpack.c.h.b16 %v98
    %v260 = vunpack.c.l.b16 %v99
    %v261 = vunpack.c.h.b16 %v99
    %v262 = vunpack.c.l.b16 %v100
    %v263 = vunpack.c.h.b16 %v100
    %v264 = vunpack.c.l.b16 %v101
    %v265 = vunpack.c.h.b16 %v101
    %v266 = vunpack.c.l.b16 %v102
    %v267 = vunpack.c.h.b16 %v102
    %v268 = vunpack.c.l.b16 %v103
    %v269 = vunpack.c.h.b16 %v103
    %v270 = vunpack.c.l.b16 %v104
    %v271 = vunpack.c.h.b16 %v104
    %v272 = vunpack.c.l.b16 %v105
    %v273 = vunpack.c.h.b16 %v105
    %v274 = vunpack.c.l.b16 %v106
    %v275 = vunpack.c.h.b16 %v106
    %v276 = vunpack.c.l.b16 %v107
    %v277 = vunpack.c.h.b16 %v107
    %v278 = vunpack.c.l.b16 %v108
    %v279 = vunpack.c.h.b16 %v108
    %v280 = vunpack.c.l.b16 %v109
    %v281 = vunpack.c.h.b16 %v109
    %v282 = vunpack.c.l.b16 %v110
    %v283 = vunpack.c.h.b16 %v110
    %v284 = vunpack.c.l.b16 %v111
    %v285 = vunpack.c.h.b16 %v111
    %v286 = vunpack.c.l.b16 %v112
    %v287 = vunpack.c.h.b16 %v112
    %v288 = vunpack.c.l.b16 %v113
    %v289 = vunpack.c.h.b16 %v113
    %v290 = vunpack.c.l.b16 %v114
    %v291 = vunpack.c.h.b16 %v114
    %v292 = vunpack.c.l.b16 %v115
    %v293 = vunpack.c.h.b16 %v115
    %v294 = vunpack.c.l.b16 %v116
    %v295 = vunpack.c.h.b16 %v116
    %v296 = vunpack.c.l.b16 %v117
    %v297 = vunpack.c.h.b16 %v117
    %v298 = vunpack.c.l.b16 %v118
    %v299 = vunpack.c.h.b16 %v118
    %v300 = vunpack.c.l.b16 %v119
    %v301 = vunpack.c.h.b16 %v119
    %v302 = vunpack.c.l.b16 %v120
    %v303 = vunpack.c.h.b16 %v120
    %v304 = vunpack.c.l.b16 %v121
    %v305 = vunpack.c.h.b16 %v121
    %v306 = vunpack.c.l.b16 %v122
    %v307 = vunpack.c.h.b16 %v122
    %v308 = vunpack.c.l.b16 %v123
    %v309 = vunpack.c.h.b16 %v123
    %v310 = vunpack.c.l.b16 %v124
    %v311 = vunpack.c.h.b16 %v124
    %v312 = vunpack.c.l.b16 %v125
    %v313 = vunpack.c.h.b16 %v125
    %v314 = vunpack.c.l.b16 %v126
    %v315 = vunpack.c.h.b16 %v126
    %v316 = vunpack.c.l.b16 %v127
    %v317 = vunpack.c.h.b16 %v127
    %v318 = vunpack.c.l.b16 %v128
    %v319 = vunpack.c.h.b16 %v128
    %v320 = vunpack.c.l.b16 %v129
    %v321 = vunpack.c.h.b16 %v129
    %v322 = vunpack.c.l.b16 %v130
    %v323 = vunpack.c.h.b16 %v130
    %v324 = vunpack.c.l.b16 %v131
    %v325 = vunpack.c.h.b16 %v131
    %v326 = vunpack.c.l.b16 %v132
    %v327 = vunpack.c.h.b16 %v132
    %v328 = vunpack.c.l.b16 %v133
    %v329 = vunpack.c.h.b16 %v133
    %v330 = vunpack.c.l.b16 %v134
    %v331 = vunpack.c.h.b16 %v134
    %v332 = vunpack.c.l.b16 %v135
    %v333 = vunpack.c.h.b16 %v135
    %v334 = vunpack.c.l.b16 %v136
    %v335 = vunpack.c.h.b16 %v136
    %v336 = vunpack.c.l.b16 %v137
    %v337 = vunpack.c.h.b16 %v137
    %v338 = vunpack.c.l.b16 %v138
    %v339 = vunpack.c.h.b16 %v138
    %v340 = vunpack.c.l.b16 %v139
    %v341 = vunpack.c.h.b16 %v139
    %v342 = vpack.c.b16 %v218, %v214
    %v343 = vpack.c.b16 %v219, %v215
    %v344 = vpack.c.b16 %v220, %v216
    %v345 = vpack.c.b16 %v221, %v217
    %v346 = vpack.c.b16 %v226, %v222
    %v347 = vpack.c.b16 %v227, %v223
    %v348 = vpack.c.b16 %v228, %v224
    %v349 = vpack.c.b16 %v229, %v225
    %v350 = vpack.c.b16 %v234, %v230
    %v351 = vpack.c.b16 %v235, %v231
    %v352 = vpack.c.b16 %v236, %v232
    %v353 = vpack.c.b16 %v237, %v233
    %v354 = vpack.c.b16 %v242, %v238
    %v355 = vpack.c.b16 %v243, %v239
    %v356 = vpack.c.b16 %v244, %v240
    %v357 = vpack.c.b16 %v245, %v241
    %v358 = vpack.c.b16 %v250, %v246
    %v359 = vpack.c.b16 %v251, %v247
    %v360 = vpack.c.b16 %v252, %v248
    %v361 = vpack.c.b16 %v253, %v249
    %v362 = vpack.c.b16 %v258, %v254
    %v363 = vpack.c.b16 %v259, %v255
    %v364 = vpack.c.b16 %v260, %v256
    %v365 = vpack.c.b16 %v261, %v257
    %v366 = vpack.c.b16 %v266, %v262
    %v367 = vpack.c.b16 %v267, %v263
    %v368 = vpack.c.b16 %v268, %v264
    %v369 = vpack.c.b16 %v269, %v265
    %v370 = vpack.c.b16 %v274, %v270
    %v371 = vpack.c.b16 %v275, %v271
    %v372 = vpack.c.b16 %v276, %v272
    %v373 = vpack.c.b16 %v277, %v273
    %v374 = vpack.c.b16 %v282, %v278
    %v375 = vpack.c.b16 %v283, %v279
    %v376 = vpack.c.b16 %v284, %v280
    %v377 = vpack.c.b16 %v285, %v281
    %v378 = vpack.c.b16 %v290, %v286
    %v379 = vpack.c.b16 %v291, %v287
    %v380 = vpack.c.b16 %v292, %v288
    %v381 = vpack.c.b16 %v293, %v289
    %v382 = vpack.c.b16 %v298, %v294
    %v383 = vpack.c.b16 %v299, %v295
    %v384 = vpack.c.b16 %v300, %v296
    %v385 = vpack.c.b16 %v301, %v297
    %v386 = vpack.c.b16 %v306, %v302
    %v387 = vpack.c.b16 %v307, %v303
    %v388 = vpack.c.b16 %v308, %v304
    %v389 = vpack.c.b16 %v309, %v305
    %v390 = vpack.c.b16 %v314, %v310
    %v391 = vpack.c.b16 %v315, %v311
    %v392 = vpack.c.b16 %v316, %v312
    %v393 = vpack.c.b16 %v317, %v313
    %v394 = vpack.c.b16 %v322, %v318
    %v395 = vpack.c.b16 %v323, %v319
    %v396 = vpack.c.b16 %v324, %v320
    %v397 = vpack.c.b16 %v325, %v321
    %v398 = vpack.c.b16 %v330, %v326
    %v399 = vpack.c.b16 %v331, %v327
    %v400 = vpack.c.b16 %v332, %v328
    %v401 = vpack.c.b16 %v333, %v329
    %v402 = vpack.c.b16 %v338, %v334
    %v403 = vpack.c.b16 %v339, %v335
    %v404 = vpack.c.b16 %v340, %v336
    %v405 = vpack.c.b16 %v341, %v337
    %470 = vmatprep.subr.bf16.mxu0 %v371
    %471 = vmatpush1.bf16.msra.mxu0 %v370
    %472 = vmatprep.subr.bf16.mxu0 %v367
    %473 = vmatpush1.bf16.msra.mxu0 %v366
    %474 = vmatprep.subr.bf16.mxu0 %v363
    %475 = vmatpush1.bf16.msra.mxu0 %v362
    %476 = vmatprep.subr.bf16.mxu0 %v359
    %477 = vmatpush1.bf16.msra.mxu0 %v358
    %478 = vmatprep.subr.bf16.mxu0 %v355
    %479 = vmatpush1.bf16.msra.mxu0 %v354
    %480 = vmatprep.subr.bf16.mxu0 %v351
    %481 = vmatpush1.bf16.msra.mxu0 %v350
    %482 = vmatprep.subr.bf16.mxu0 %v347
    %483 = vmatpush1.bf16.msra.mxu0 %v346
    %484 = vmatprep.subr.bf16.mxu0 %v343
    %485 = vmatpush1.bf16.msra.mxu0 %v342
    %486 = vmatprep.subr.bf16.mxu0 %v403
    %487 = vmatpush2.bf16.msra.mxu0 %v402
    %488 = vmatprep.subr.bf16.mxu0 %v399
    %489 = vmatpush2.bf16.msra.mxu0 %v398
    %490 = vmatprep.subr.bf16.mxu0 %v395
    %491 = vmatpush2.bf16.msra.mxu0 %v394
    %492 = vmatprep.subr.bf16.mxu0 %v391
    %493 = vmatpush2.bf16.msra.mxu0 %v390
    %494 = vmatprep.subr.bf16.mxu0 %v387
    %495 = vmatpush2.bf16.msra.mxu0 %v386
    %496 = vmatprep.subr.bf16.mxu0 %v383
    %497 = vmatpush2.bf16.msra.mxu0 %v382
    %498 = vmatprep.subr.bf16.mxu0 %v379
    %499 = vmatpush2.bf16.msra.mxu0 %v378
    %500 = vmatprep.subr.bf16.mxu0 %v375
    %501 = vmatpush2.bf16.msra.mxu0 %v374
    %502 = vmatprep.mubr.bf16.mxu0 %v147
    %503 = vmatmul.mubr.bf16.gmra.mxu0 %v146
    %v504 = vpop.f32.mrf.mxu0
    %v505 = vadd.f32 0.0, %v504
    %v506 = vpop.f32.mrf.mxu0
    %v507 = vadd.f32 0.0, %v506
    %v508 = vpop.f32.mrf.mxu0
    %v509 = vadd.f32 0.0, %v508
    %v510 = vpop.f32.mrf.mxu0
    %v511 = vadd.f32 0.0, %v510
    %512 = vdwg.mxu0
    %513 = vmatprep.subr.bf16.mxu0 %v373
    %514 = vmatpush1.bf16.msra.mxu0 %v372
    %515 = vmatprep.subr.bf16.mxu0 %v369
    %516 = vmatpush1.bf16.msra.mxu0 %v368
    %517 = vmatprep.subr.bf16.mxu0 %v365
    %518 = vmatpush1.bf16.msra.mxu0 %v364
    %519 = vmatprep.subr.bf16.mxu0 %v361
    %520 = vmatpush1.bf16.msra.mxu0 %v360
    %521 = vmatprep.subr.bf16.mxu0 %v357
    %522 = vmatpush1.bf16.msra.mxu0 %v356
    %523 = vmatprep.subr.bf16.mxu0 %v353
    %524 = vmatpush1.bf16.msra.mxu0 %v352
    %525 = vmatprep.subr.bf16.mxu0 %v349
    %526 = vmatpush1.bf16.msra.mxu0 %v348
    %527 = vmatprep.subr.bf16.mxu0 %v345
    %528 = vmatpush1.bf16.msra.mxu0 %v344
    %529 = vmatprep.subr.bf16.mxu0 %v405
    %530 = vmatpush2.bf16.msra.mxu0 %v404
    %531 = vmatprep.subr.bf16.mxu0 %v401
    %532 = vmatpush2.bf16.msra.mxu0 %v400
    %533 = vmatprep.subr.bf16.mxu0 %v397
    %534 = vmatpush2.bf16.msra.mxu0 %v396
    %535 = vmatprep.subr.bf16.mxu0 %v393
    %536 = vmatpush2.bf16.msra.mxu0 %v392
    %537 = vmatprep.subr.bf16.mxu0 %v389
    %538 = vmatpush2.bf16.msra.mxu0 %v388
    %539 = vmatprep.subr.bf16.mxu0 %v385
    %540 = vmatpush2.bf16.msra.mxu0 %v384
    %541 = vmatprep.subr.bf16.mxu0 %v381
    %542 = vmatpush2.bf16.msra.mxu0 %v380
    %543 = vmatprep.subr.bf16.mxu0 %v377
    %544 = vmatpush2.bf16.msra.mxu0 %v376
    %545 = vmatprep.mubr.bf16.mxu0 %v147
    %546 = vmatmul.mubr.bf16.gmra.mxu0 %v146
    %v547 = vpop.f32.mrf.mxu0
    %v548 = vadd.f32 0.0, %v547
    %v549 = vpop.f32.mrf.mxu0
    %v550 = vadd.f32 0.0, %v549
    %v551 = vpop.f32.mrf.mxu0
    %v552 = vadd.f32 0.0, %v551
    %v553 = vpop.f32.mrf.mxu0
    %v554 = vadd.f32 0.0, %v553
    %555 = vdwg.mxu0
    %v556 = vadd.f32 %v66, %v505
    %v557 = vadd.f32 %v67, %v507
    %v558 = vadd.f32 %v68, %v548
    %v559 = vadd.f32 %v69, %v550
    %v560 = vadd.f32 %v70, %v509
    %v561 = vadd.f32 %v71, %v511
    %v562 = vadd.f32 %v72, %v552
    %v563 = vadd.f32 %v73, %v554
    %564 = vst [vmem:[#allocation2] sm:$0xff] %v556
    %565 = vst [vmem:[#allocation2 + $0x8] sm:$0xff] %v557
    %566 = vst [vmem:[#allocation2 + $0x10] sm:$0xff] %v558
    %567 = vst [vmem:[#allocation2 + $0x18] sm:$0xff] %v559
    %568 = vst [vmem:[#allocation2 + $0x20] sm:$0xff] %v560
    %569 = vst [vmem:[#allocation2 + $0x28] sm:$0xff] %v561
    %570 = vst [vmem:[#allocation2 + $0x30] sm:$0xff] %v562
    %571 = vst [vmem:[#allocation2 + $0x38] sm:$0xff] %v563
    // Predicated region
    $region30: #{tpu_custom_call.1} parent=1 // pred_check
      %p572 = pneg %p54
    $region31: #{tpu_custom_call.1} parent=1 // pred_check_branch
      %574 = sbr.rel (%p572) target = $region33
    $region32: #{tpu_custom_call.1} parent=1 // pred_region
      %v575 = vld [vmem:[#allocation2] sm:$0xff]
      %v576 = vld [vmem:[#allocation2 + $0x8] sm:$0xff]
      %v577 = vld [vmem:[#allocation2 + $0x10] sm:$0xff]
      %v578 = vld [vmem:[#allocation2 + $0x18] sm:$0xff]
      %v579 = vld [vmem:[#allocation2 + $0x20] sm:$0xff]
      %v580 = vld [vmem:[#allocation2 + $0x28] sm:$0xff]
      %v581 = vld [vmem:[#allocation2 + $0x30] sm:$0xff]
      %v582 = vld [vmem:[#allocation2 + $0x38] sm:$0xff]
      %v583 = vld [vmem:[#allocation8] sm:$0xf]
      %v585 = vlaneseq
      %v586 = vshrl.u32 %v585, 7
      %v587 = vsub.s32 0, %v586
      %v588 = vrot.slane %v583, %v587
      %v589 = vlaneseq
      %v590 = vshrl.u32 %v589, 7
      %v591 = vsub.s32 1, %v590
      %v592 = vrot.slane %v583, %v591
      %v593 = vlaneseq
      %v594 = vshrl.u32 %v593, 7
      %v595 = vsub.s32 2, %v594
      %v596 = vrot.slane %v583, %v595
      %v597 = vlaneseq
      %v598 = vshrl.u32 %v597, 7
      %v599 = vsub.s32 3, %v598
      %v600 = vrot.slane %v583, %v599
      %v605 = vadd.f32 %v575, %v588
      %v606 = vadd.f32 %v576, %v592
      %v607 = vadd.f32 %v577, %v596
      %v608 = vadd.f32 %v578, %v600
      %v609 = vadd.f32 %v579, %v588
      %v610 = vadd.f32 %v580, %v592
      %v611 = vadd.f32 %v581, %v596
      %v612 = vadd.f32 %v582, %v600
      %613 = vst [vmem:[#allocation9] sm:$0xff] %v605
      %614 = vst [vmem:[#allocation9 + $0x8] sm:$0xff] %v606
      %615 = vst [vmem:[#allocation9 + $0x10] sm:$0xff] %v607
      %616 = vst [vmem:[#allocation9 + $0x18] sm:$0xff] %v608
      %617 = vst [vmem:[#allocation9 + $0x20] sm:$0xff] %v609
      %618 = vst [vmem:[#allocation9 + $0x28] sm:$0xff] %v610
      %619 = vst [vmem:[#allocation9 + $0x30] sm:$0xff] %v611
      %620 = vst [vmem:[#allocation9 + $0x38] sm:$0xff] %v612
    $region33: #{tpu_custom_call.1} parent=1 // pred_fallthru
      _
    // Predicated region
    $region34: #{tpu_custom_call.1} parent=1 // pred_check
      _
    $region35: #{tpu_custom_call.1} parent=1 // pred_check_branch
      %622 = sbr.rel (0) target = $region37
    $region36: #{tpu_custom_call.1} parent=1 // pred_region
      %s624 = ssub.s32 1024, 1024
      %625 = vsyncadd [#allocation5], %s624
      %s626 = sshll.u32 [#allocation9], 4
      %s627 = int_to_ptr.vmem [resolvable:$true] %s626
      %632 = dma.vmem_to_hbm [thread:$0]  %s627, 1024, %s3, [#allocation5], 512, 512, 32
    $region37: #{tpu_custom_call.1} parent=1 // pred_fallthru
      _
    // Predicated region
    $region38: #{tpu_custom_call.1} parent=1 // pred_check
      _
    $region39: #{tpu_custom_call.1} parent=1 // pred_check_branch
      %634 = sbr.rel (0) target = $region41
    $region40: #{tpu_custom_call.1} parent=1 // pred_region
      %635 = dma.done [#allocation5], 1024
    $region41: #{tpu_custom_call.1} parent=1 // pred_fallthru
      _
    %636 = vsyncpa [#allocation4], 1
    %637 = vsyncpa [#allocation7], 1
    %638 = vsyncpa [#allocation5], 1

</llo_original>
